<compile_context>
chip_gen: v5e
topology: v5e:2x2
jax: 0.10.0
libtpu: 0.0.40
codegen_flags: <defaults>
</compile_context>

<pallas_src>
import numpy as np
import jax
import jax.numpy as jnp
from jax.experimental import pallas as pl
from jax.experimental.pallas import tpu as pltpu

K = 5            # Conv1d kernel_size
PAD = 2          # Conv1d padding
POOL_OUT = 100   # AdaptiveAvgPool1d(100)
LANES = 128      # lane-dense output width (POOL_OUT padded up to 128)


def convnet_kernel(x_ref, wconv_ref, b_ref, pool_ref, out_ref):
    # x_ref:     (TN, C*L)  batch tile of the input, flattened over (C, L)
    # wconv_ref: (C*L, L)   banded conv weights (conv expressed as a matmul)
    # b_ref:     (1,)       conv bias, SMEM scalar
    # pool_ref:  (L, 128)   adaptive-avg-pool weights, zero-padded to 128 lanes
    # out_ref:   (TN, 128)  lane-dense output tile
    y = jnp.dot(x_ref[...], wconv_ref[...],
                preferred_element_type=jnp.float32)              # (TN, L) conv
    y = jnp.maximum(y + b_ref[0], 0.0)                           # bias + ReLU
    out_ref[...] = jnp.dot(y, pool_ref[...],
                           preferred_element_type=jnp.float32)   # (TN, 128) pool


def adaptive_pool_matrix(L: int, out_len: int, padded_len: int) -> jnp.ndarray:
    """(L, padded_len) matrix implementing PyTorch AdaptiveAvgPool1d exactly:
    output[i] averages input[floor(i*L/out) : ceil((i+1)*L/out)]; columns
    out_len..padded_len-1 are zero (lane padding)."""
    mat = np.zeros((L, padded_len), dtype=np.float32)
    for i in range(out_len):
        start = (i * L) // out_len
        end = -((-(i + 1) * L) // out_len)          # ceil((i+1)*L/out_len)
        mat[start:end, i] = 1.0 / float(end - start)
    return jnp.asarray(mat)


def conv_band_matrix(conv_w: jnp.ndarray, L: int) -> jnp.ndarray:
    """Banded matrix W (C*L, L) with W[c*L + m, l] = w[c, m - l + PAD] when
    0 <= m - l + PAD < K, else 0.  Then conv1d(x, w, pad=2) == x.reshape(N, C*L) @ W,
    with the zero-padding boundary handled by the band structure."""
    w = conv_w[0]                                     # (C, K)
    C = w.shape[0]
    m = jnp.arange(L)[:, None]
    l = jnp.arange(L)[None, :]
    k = m - l + PAD                                   # (L, L) tap index
    valid = (k >= 0) & (k < K)
    k_safe = jnp.clip(k, 0, K - 1)
    band = jnp.where(valid[None, :, :], w[:, k_safe], 0.0)   # (C, L, L)
    return band.reshape(C * L, L)


def _round_up(a: int, b: int) -> int:
    return ((a + b - 1) // b) * b


def convnet_forward(x, conv_w, conv_b, *, tn_max=128):
    """x: (N, C, L) float32; conv_w: (1, C, K); conv_b: (1,). Returns (N, 1, 100)."""
    N, C, L = x.shape

    # Batch tile: multiple of 8 sublanes, capped at tn_max rows per grid step.
    TN = min(tn_max, _round_up(N, 8))
    N_pad = _round_up(N, TN)

    x2 = x.reshape(N, C * L)                   # layout-compatible (free) reshape
    if N_pad != N:
        x2 = jnp.pad(x2, ((0, N_pad - N), (0, 0)))   # only batch remainder rows

    w_band = conv_band_matrix(conv_w, L)                     # (C*L, L)
    pool_mat = adaptive_pool_matrix(L, POOL_OUT, LANES)      # (L, 128)

    out = pl.pallas_call(
        convnet_kernel,
        out_shape=jax.ShapeDtypeStruct((N_pad, LANES), jnp.float32),
        grid=(N_pad // TN,),
        in_specs=[
            pl.BlockSpec((TN, C * L), lambda i: (i, 0)),      # x tile (pipelined)
            pl.BlockSpec((C * L, L), lambda i: (0, 0)),       # conv band (resident)
            pl.BlockSpec(memory_space=pltpu.MemorySpace.SMEM),  # bias scalar
            pl.BlockSpec((L, LANES), lambda i: (0, 0)),       # pool matrix (resident)
        ],
        out_specs=pl.BlockSpec((TN, LANES), lambda i: (i, 0)),
        compiler_params=pltpu.CompilerParams(
            dimension_semantics=("parallel",)),               # v7x: shard batch over 2 TCs
    )(x2, w_band, conv_b, pool_mat)

    return out[:N, :POOL_OUT][:, None, :]                     # (N, 1, 100)


def reference_forward(x, conv_w, conv_b):
    """Exact-f32 plain-JAX reference (elementwise conv + highest-precision pool)."""
    N, C, L = x.shape
    xp = jnp.pad(x, ((0, 0), (0, 0), (PAD, PAD)))
    w = conv_w[0]
    y = sum(jnp.sum(xp[:, :, k:k + L] * w[:, k][None, :, None], axis=1)
            for k in range(K))
    y = jnp.maximum(y + conv_b[0], 0.0)                       # (N, L)
    pool = adaptive_pool_matrix(L, POOL_OUT, POOL_OUT)        # (L, 100)
    out = jnp.dot(y, pool, precision=jax.lax.Precision.HIGHEST)
    return out[:, None, :]                                    # (N, 1, 100)


if __name__ == "__main__":
    N, C, L = 2, 4, 160  # batch=2, in_channels=4, in_seq_len=160

    key = jax.random.PRNGKey(0)
    kx, kw, kb = jax.random.split(key, 3)

    x = jax.random.normal(kx, (N, C, L), dtype=jnp.float32)

    # Deterministic init mimicking PyTorch Conv1d default: U(-sqrt(k), sqrt(k)), k = 1/(C*K)
    bound = 1.0 / np.sqrt(C * K)
    conv_w = jax.random.uniform(kw, (1, C, K), minval=-bound, maxval=bound, dtype=jnp.float32)
    conv_b = jax.random.uniform(kb, (1,), minval=-bound, maxval=bound, dtype=jnp.float32)

    out = jax.block_until_ready(convnet_forward(x, conv_w, conv_b))
    ref = jax.block_until_ready(reference_forward(x, conv_w, conv_b))

    assert out.shape == (N, 1, POOL_OUT), out.shape
    err = np.max(np.abs(np.asarray(out) - np.asarray(ref)))
    assert np.allclose(np.asarray(out), np.asarray(ref), atol=5e-4, rtol=5e-4), err

    print("KERNEL_OK")
</pallas_src>

<mosaic_0001>
module attributes {stable_mosaic.version = 11 : i64} {
  func.func @convnet_kernel(%arg0: i32, %arg1: memref<8x640xf32, #tpu.memory_space<vmem>>, %arg2: memref<640x160xf32, #tpu.memory_space<vmem>>, %arg3: memref<1xf32, #tpu.memory_space<smem>>, %arg4: memref<160x128xf32, #tpu.memory_space<vmem>>, %arg5: memref<8x128xf32, #tpu.memory_space<vmem>>) attributes {dimension_semantics = [#tpu.dimension_semantics<parallel>], iteration_bounds = array<i64: 1>, scalar_prefetch = 0 : i64, scratch_operands = 0 : i64, tpu.core_type = #tpu.core_type<tc>, window_params = [{transform_indices = @transform_0, window_bounds = array<i64: 8, 640>}, {pipeline_mode = #tpu.pipeline_mode<synchronous>, transform_indices = @transform_1, window_bounds = array<i64: 640, 160>}, {transform_indices = @transform_2, window_bounds = array<i64: 1>}, {pipeline_mode = #tpu.pipeline_mode<synchronous>, transform_indices = @transform_3, window_bounds = array<i64: 160, 128>}, {transform_indices = @transform_4, window_bounds = array<i64: 8, 128>}]} {
    %c0 = arith.constant 0 : index
    %c0_0 = arith.constant 0 : index
    %0 = vector.load %arg1[%c0, %c0_0] : memref<8x640xf32, #tpu.memory_space<vmem>>, vector<8x640xf32>
    %c0_1 = arith.constant 0 : index
    %c0_2 = arith.constant 0 : index
    %1 = vector.load %arg2[%c0_1, %c0_2] : memref<640x160xf32, #tpu.memory_space<vmem>>, vector<640x160xf32>
    %cst = arith.constant dense<0.000000e+00> : vector<8x160xf32>
    %2 = tpu.matmul %0, %1, %cst {dimension_numbers = #tpu.dot_dimension_numbers<[1], [0], [0], [1], [0, 0, 1, 1], [], []>} : vector<8x640xf32>, vector<640x160xf32>, vector<8x160xf32> -> vector<8x160xf32>
    %c0_3 = arith.constant 0 : index
    %3 = memref.load %arg3[%c0_3] : memref<1xf32, #tpu.memory_space<smem>>
    %4 = vector.broadcast %3 : f32 to vector<8x160xf32>
    %5 = arith.addf %2, %4 : vector<8x160xf32>
    %cst_4 = arith.constant 0.000000e+00 : f32
    %6 = vector.broadcast %cst_4 : f32 to vector<8x160xf32>
    %7 = arith.maximumf %5, %6 : vector<8x160xf32>
    %c0_5 = arith.constant 0 : index
    %c0_6 = arith.constant 0 : index
    %8 = vector.load %arg4[%c0_5, %c0_6] : memref<160x128xf32, #tpu.memory_space<vmem>>, vector<160x128xf32>
    %cst_7 = arith.constant dense<0.000000e+00> : vector<8x128xf32>
    %9 = tpu.matmul %7, %8, %cst_7 {dimension_numbers = #tpu.dot_dimension_numbers<[1], [0], [0], [1], [0, 0, 1, 1], [], []>} : vector<8x160xf32>, vector<160x128xf32>, vector<8x128xf32> -> vector<8x128xf32>
    %c0_8 = arith.constant 0 : index
    %c0_9 = arith.constant 0 : index
    %10 = vector.load %arg5[%c0_8, %c0_9] : memref<8x128xf32, #tpu.memory_space<vmem>>, vector<8x128xf32>
    tpu.vector_store %arg5[%c0_8, %c0_9], %9 {strides = array<i32>} : memref<8x128xf32, #tpu.memory_space<vmem>>, vector<8x128xf32>,
    return
  }
  func.func @transform_0(%arg0: i32) -> (i32, i32) {
    %c0_i32 = arith.constant 0 : i32
    %c0_i32_0 = arith.constant 0 : i32
    return %arg0, %c0_i32 : i32, i32
  }
  func.func @transform_1(%arg0: i32) -> (i32, i32) {
    %c0_i32 = arith.constant 0 : i32
    %c0_i32_0 = arith.constant 0 : i32
    %c0_i32_1 = arith.constant 0 : i32
    return %c0_i32, %c0_i32_0 : i32, i32
  }
  func.func @transform_2(%arg0: i32) -> i32 {
    %c0_i32 = arith.constant 0 : i32
    %c0_i32_0 = arith.constant 0 : i32
    return %c0_i32 : i32
  }
  func.func @transform_3(%arg0: i32) -> (i32, i32) {
    %c0_i32 = arith.constant 0 : i32
    %c0_i32_0 = arith.constant 0 : i32
    %c0_i32_1 = arith.constant 0 : i32
    return %c0_i32, %c0_i32_0 : i32, i32
  }
  func.func @transform_4(%arg0: i32) -> (i32, i32) {
    %c0_i32 = arith.constant 0 : i32
    %c0_i32_0 = arith.constant 0 : i32
    return %arg0, %c0_i32 : i32, i32
  }
}

</mosaic_0001>

<llo_original>
// kernel: tpu_custom_call.1
$region0: #{tpu_custom_call.1}
  #allocation0 [shape = 'u32[]', space=smem, size = 0x4, offset = 0x4, fixed_abs, tag = 'smem constant byte address 0x4 - core index']
  #allocation1 [shape = 'u32[72,128]{1,0:T(1,128)}', space=vmem, size = 0x9000, scoped, tag = 'internal scratch']
  #allocation2 [shape = 'f32[1]{0:T(128)S(6)}', space=smem, size = 0x200, scoped, tag = 'scoped memory for tpu_custom_call.1']
  %s0 = inlined_call_operand.vmem [shape: f32[8,640], index: 0, kind: input, shape index: {}]
  %s1 = inlined_call_operand.vmem [shape: f32[640,160], index: 1, kind: input, shape index: {}]
  %s2 = inlined_call_operand.<no memory space> [shape: f32[1], index: 2, kind: input, shape index: {}]
  %s3 = inlined_call_operand.vmem [shape: f32[160,128], index: 3, kind: input, shape index: {}]
  %s4 = inlined_call_operand.hbm [shape: f32[8,128], index: 4, kind: output, shape index: {}]
  %s5 = sld [smem:[#allocation0]]
  $region26: #{tpu_custom_call.1} parent=0
    _
  %s7 = ssub.s32 1, %s5
  %s8 = scalar_select 0, %s7, %s5
  %9 = sst [smem:[#allocation2]] %s2
  $region1: #{tpu_custom_call.1} parent=0
    #allocation3 [shape = 'u8[4096]{0}', space=vmem, size = 0x1000, scoped, tag = 'output window, operand 0, single buffered']
    #allocation4 [shape = 's32[1]{0}', space=sflag, size = 0x4, scoped, tag = 'scoped memory for tpu_custom_call.1']
    %10 = vsyncpa [#allocation4], 0
    // Predicated region
    $region2: #{tpu_custom_call.1} parent=1 // pred_check
      _
    $region3: #{tpu_custom_call.1} parent=1 // pred_check_branch
      %12 = sbr.rel (0) target = $region5
    $region4: #{tpu_custom_call.1} parent=1 // pred_region
      _
    $region5: #{tpu_custom_call.1} parent=1 // pred_fallthru
      _
    // Predicated region
    $region6: #{tpu_custom_call.1} parent=1 // pred_check
      _
    $region7: #{tpu_custom_call.1} parent=1 // pred_check_branch
      %14 = sbr.rel (0) target = $region9
    $region8: #{tpu_custom_call.1} parent=1 // pred_region
      _
    $region9: #{tpu_custom_call.1} parent=1 // pred_fallthru
      _
    // Predicated region
    $region10: #{tpu_custom_call.1} parent=1 // pred_check
      _
    $region11: #{tpu_custom_call.1} parent=1 // pred_check_branch
      %16 = sbr.rel (0) target = $region13
    $region12: #{tpu_custom_call.1} parent=1 // pred_region
      _
    $region13: #{tpu_custom_call.1} parent=1 // pred_fallthru
      _
    // Predicated region
    $region14: #{tpu_custom_call.1} parent=1 // pred_check
      _
    $region15: #{tpu_custom_call.1} parent=1 // pred_check_branch
      %18 = sbr.rel (0) target = $region17
    $region16: #{tpu_custom_call.1} parent=1 // pred_region
      _
    $region17: #{tpu_custom_call.1} parent=1 // pred_fallthru
      _
    %v19 = vld [vmem:[%s0] sm:$0xff]
    %v20 = vld [vmem:[%s0 + $0x8] sm:$0xff]
    %v21 = vld [vmem:[%s0 + $0x10] sm:$0xff]
    %v22 = vld [vmem:[%s0 + $0x18] sm:$0xff]
    %v23 = vld [vmem:[%s0 + $0x20] sm:$0xff]
    %v24 = vld [vmem:[%s1] sm:$0xff]
    %v25 = vld [vmem:[%s1 + $0x8] sm:$0xff]
    %v26 = vld [vmem:[%s1 + $0x10] sm:$0xff]
    %v27 = vld [vmem:[%s1 + $0x18] sm:$0xff]
    %v28 = vld [vmem:[%s1 + $0x20] sm:$0xff]
    %v29 = vld [vmem:[%s1 + $0x28] sm:$0xff]
    %v30 = vld [vmem:[%s1 + $0x30] sm:$0xff]
    %v31 = vld [vmem:[%s1 + $0x38] sm:$0xff]
    %v32 = vld [vmem:[%s1 + $0x40] sm:$0xff]
    %v33 = vld [vmem:[%s1 + $0x48] sm:$0xff]
    %v34 = vld [vmem:[%s1 + $0x50] sm:$0xff]
    %v35 = vld [vmem:[%s1 + $0x58] sm:$0xff]
    %v36 = vld [vmem:[%s1 + $0x60] sm:$0xff]
    %v37 = vld [vmem:[%s1 + $0x68] sm:$0xff]
    %v38 = vld [vmem:[%s1 + $0x70] sm:$0xff]
    %v39 = vld [vmem:[%s1 + $0x78] sm:$0xff]
    %v40 = vld [vmem:[%s1 + $0x80] sm:$0xff]
    %v41 = vld [vmem:[%s1 + $0x88] sm:$0xff]
    %v42 = vld [vmem:[%s1 + $0x90] sm:$0xff]
    %v43 = vld [vmem:[%s1 + $0x98] sm:$0xff]
    %v44 = vld [vmem:[%s1 + $0xa0] sm:$0xff]
    %v45 = vld [vmem:[%s1 + $0xa8] sm:$0xff]
    %v46 = vld [vmem:[%s1 + $0xb0] sm:$0xff]
    %v47 = vld [vmem:[%s1 + $0xb8] sm:$0xff]
    %v48 = vld [vmem:[%s1 + $0xc0] sm:$0xff]
    %v49 = vld [vmem:[%s1 + $0xc8] sm:$0xff]
    %v50 = vld [vmem:[%s1 + $0xd0] sm:$0xff]
    %v51 = vld [vmem:[%s1 + $0xd8] sm:$0xff]
    %v52 = vld [vmem:[%s1 + $0xe0] sm:$0xff]
    %v53 = vld [vmem:[%s1 + $0xe8] sm:$0xff]
    %v54 = vld [vmem:[%s1 + $0xf0] sm:$0xff]
    %v55 = vld [vmem:[%s1 + $0xf8] sm:$0xff]
    %v56 = vld [vmem:[%s1 + $0x100] sm:$0xff]
    %v57 = vld [vmem:[%s1 + $0x108] sm:$0xff]
    %v58 = vld [vmem:[%s1 + $0x110] sm:$0xff]
    %v59 = vld [vmem:[%s1 + $0x118] sm:$0xff]
    %v60 = vld [vmem:[%s1 + $0x120] sm:$0xff]
    %v61 = vld [vmem:[%s1 + $0x128] sm:$0xff]
    %v62 = vld [vmem:[%s1 + $0x130] sm:$0xff]
    %v63 = vld [vmem:[%s1 + $0x138] sm:$0xff]
    %v64 = vld [vmem:[%s1 + $0x140] sm:$0xff]
    %v65 = vld [vmem:[%s1 + $0x148] sm:$0xff]
    %v66 = vld [vmem:[%s1 + $0x150] sm:$0xff]
    %v67 = vld [vmem:[%s1 + $0x158] sm:$0xff]
    %v68 = vld [vmem:[%s1 + $0x160] sm:$0xff]
    %v69 = vld [vmem:[%s1 + $0x168] sm:$0xff]
    %v70 = vld [vmem:[%s1 + $0x170] sm:$0xff]
    %v71 = vld [vmem:[%s1 + $0x178] sm:$0xff]
    %v72 = vld [vmem:[%s1 + $0x180] sm:$0xff]
    %v73 = vld [vmem:[%s1 + $0x188] sm:$0xff]
    %v74 = vld [vmem:[%s1 + $0x190] sm:$0xff]
    %v75 = vld [vmem:[%s1 + $0x198] sm:$0xff]
    %v76 = vld [vmem:[%s1 + $0x1a0] sm:$0xff]
    %v77 = vld [vmem:[%s1 + $0x1a8] sm:$0xff]
    %v78 = vld [vmem:[%s1 + $0x1b0] sm:$0xff]
    %v79 = vld [vmem:[%s1 + $0x1b8] sm:$0xff]
    %v80 = vld [vmem:[%s1 + $0x1c0] sm:$0xff]
    %v81 = vld [vmem:[%s1 + $0x1c8] sm:$0xff]
    %v82 = vld [vmem:[%s1 + $0x1d0] sm:$0xff]
    %v83 = vld [vmem:[%s1 + $0x1d8] sm:$0xff]
    %v84 = vld [vmem:[%s1 + $0x1e0] sm:$0xff]
    %v85 = vld [vmem:[%s1 + $0x1e8] sm:$0xff]
    %v86 = vld [vmem:[%s1 + $0x1f0] sm:$0xff]
    %v87 = vld [vmem:[%s1 + $0x1f8] sm:$0xff]
    %v88 = vld [vmem:[%s1 + $0x200] sm:$0xff]
    %v89 = vld [vmem:[%s1 + $0x208] sm:$0xff]
    %v90 = vld [vmem:[%s1 + $0x210] sm:$0xff]
    %v91 = vld [vmem:[%s1 + $0x218] sm:$0xff]
    %v92 = vld [vmem:[%s1 + $0x220] sm:$0xff]
    %v93 = vld [vmem:[%s1 + $0x228] sm:$0xff]
    %v94 = vld [vmem:[%s1 + $0x230] sm:$0xff]
    %v95 = vld [vmem:[%s1 + $0x238] sm:$0xff]
    %v96 = vld [vmem:[%s1 + $0x240] sm:$0xff]
    %v97 = vld [vmem:[%s1 + $0x248] sm:$0xff]
    %v98 = vld [vmem:[%s1 + $0x250] sm:$0xff]
    %v99 = vld [vmem:[%s1 + $0x258] sm:$0xff]
    %v100 = vld [vmem:[%s1 + $0x260] sm:$0xff]
    %v101 = vld [vmem:[%s1 + $0x268] sm:$0xff]
    %v102 = vld [vmem:[%s1 + $0x270] sm:$0xff]
    %v103 = vld [vmem:[%s1 + $0x278] sm:$0xff]
    %v104 = vld [vmem:[%s1 + $0x280] sm:$0xff]
    %v105 = vld [vmem:[%s1 + $0x288] sm:$0xff]
    %v106 = vld [vmem:[%s1 + $0x290] sm:$0xff]
    %v107 = vld [vmem:[%s1 + $0x298] sm:$0xff]
    %v108 = vld [vmem:[%s1 + $0x2a0] sm:$0xff]
    %v109 = vld [vmem:[%s1 + $0x2a8] sm:$0xff]
    %v110 = vld [vmem:[%s1 + $0x2b0] sm:$0xff]
    %v111 = vld [vmem:[%s1 + $0x2b8] sm:$0xff]
    %v112 = vld [vmem:[%s1 + $0x2c0] sm:$0xff]
    %v113 = vld [vmem:[%s1 + $0x2c8] sm:$0xff]
    %v114 = vld [vmem:[%s1 + $0x2d0] sm:$0xff]
    %v115 = vld [vmem:[%s1 + $0x2d8] sm:$0xff]
    %v116 = vld [vmem:[%s1 + $0x2e0] sm:$0xff]
    %v117 = vld [vmem:[%s1 + $0x2e8] sm:$0xff]
    %v118 = vld [vmem:[%s1 + $0x2f0] sm:$0xff]
    %v119 = vld [vmem:[%s1 + $0x2f8] sm:$0xff]
    %v120 = vld [vmem:[%s1 + $0x300] sm:$0xff]
    %v121 = vld [vmem:[%s1 + $0x308] sm:$0xff]
    %v122 = vld [vmem:[%s1 + $0x310] sm:$0xff]
    %v123 = vld [vmem:[%s1 + $0x318] sm:$0xff]
    %v124 = vld [vmem:[%s1 + $0x320] sm:$0xff]
    %v125 = vld [vmem:[%s1 + $0x328] sm:$0xff]
    %v126 = vld [vmem:[%s1 + $0x330] sm:$0xff]
    %v127 = vld [vmem:[%s1 + $0x338] sm:$0xff]
    %v128 = vld [vmem:[%s1 + $0x340] sm:$0xff]
    %v129 = vld [vmem:[%s1 + $0x348] sm:$0xff]
    %v130 = vld [vmem:[%s1 + $0x350] sm:$0xff]
    %v131 = vld [vmem:[%s1 + $0x358] sm:$0xff]
    %v132 = vld [vmem:[%s1 + $0x360] sm:$0xff]
    %v133 = vld [vmem:[%s1 + $0x368] sm:$0xff]
    %v134 = vld [vmem:[%s1 + $0x370] sm:$0xff]
    %v135 = vld [vmem:[%s1 + $0x378] sm:$0xff]
    %v136 = vld [vmem:[%s1 + $0x380] sm:$0xff]
    %v137 = vld [vmem:[%s1 + $0x388] sm:$0xff]
    %v138 = vld [vmem:[%s1 + $0x390] sm:$0xff]
    %v139 = vld [vmem:[%s1 + $0x398] sm:$0xff]
    %v140 = vld [vmem:[%s1 + $0x3a0] sm:$0xff]
    %v141 = vld [vmem:[%s1 + $0x3a8] sm:$0xff]
    %v142 = vld [vmem:[%s1 + $0x3b0] sm:$0xff]
    %v143 = vld [vmem:[%s1 + $0x3b8] sm:$0xff]
    %v144 = vld [vmem:[%s1 + $0x3c0] sm:$0xff]
    %v145 = vld [vmem:[%s1 + $0x3c8] sm:$0xff]
    %v146 = vld [vmem:[%s1 + $0x3d0] sm:$0xff]
    %v147 = vld [vmem:[%s1 + $0x3d8] sm:$0xff]
    %v148 = vld [vmem:[%s1 + $0x3e0] sm:$0xff]
    %v149 = vld [vmem:[%s1 + $0x3e8] sm:$0xff]
    %v150 = vld [vmem:[%s1 + $0x3f0] sm:$0xff]
    %v151 = vld [vmem:[%s1 + $0x3f8] sm:$0xff]
    %v152 = vld [vmem:[%s1 + $0x400] sm:$0xff]
    %v153 = vld [vmem:[%s1 + $0x408] sm:$0xff]
    %v154 = vld [vmem:[%s1 + $0x410] sm:$0xff]
    %v155 = vld [vmem:[%s1 + $0x418] sm:$0xff]
    %v156 = vld [vmem:[%s1 + $0x420] sm:$0xff]
    %v157 = vld [vmem:[%s1 + $0x428] sm:$0xff]
    %v158 = vld [vmem:[%s1 + $0x430] sm:$0xff]
    %v159 = vld [vmem:[%s1 + $0x438] sm:$0xff]
    %v160 = vld [vmem:[%s1 + $0x440] sm:$0xff]
    %v161 = vld [vmem:[%s1 + $0x448] sm:$0xff]
    %v162 = vld [vmem:[%s1 + $0x450] sm:$0xff]
    %v163 = vld [vmem:[%s1 + $0x458] sm:$0xff]
    %v164 = vld [vmem:[%s1 + $0x460] sm:$0xff]
    %v165 = vld [vmem:[%s1 + $0x468] sm:$0xff]
    %v166 = vld [vmem:[%s1 + $0x470] sm:$0xff]
    %v167 = vld [vmem:[%s1 + $0x478] sm:$0xff]
    %v168 = vld [vmem:[%s1 + $0x480] sm:$0xff]
    %v169 = vld [vmem:[%s1 + $0x488] sm:$0xff]
    %v170 = vld [vmem:[%s1 + $0x490] sm:$0xff]
    %v171 = vld [vmem:[%s1 + $0x498] sm:$0xff]
    %v172 = vld [vmem:[%s1 + $0x4a0] sm:$0xff]
    %v173 = vld [vmem:[%s1 + $0x4a8] sm:$0xff]
    %v174 = vld [vmem:[%s1 + $0x4b0] sm:$0xff]
    %v175 = vld [vmem:[%s1 + $0x4b8] sm:$0xff]
    %v176 = vld [vmem:[%s1 + $0x4c0] sm:$0xff]
    %v177 = vld [vmem:[%s1 + $0x4c8] sm:$0xff]
    %v178 = vld [vmem:[%s1 + $0x4d0] sm:$0xff]
    %v179 = vld [vmem:[%s1 + $0x4d8] sm:$0xff]
    %v180 = vld [vmem:[%s1 + $0x4e0] sm:$0xff]
    %v181 = vld [vmem:[%s1 + $0x4e8] sm:$0xff]
    %v182 = vld [vmem:[%s1 + $0x4f0] sm:$0xff]
    %v183 = vld [vmem:[%s1 + $0x4f8] sm:$0xff]
    %s184 = sld [smem:[#allocation2]]
    %v185 = vstv %s184
    %186 = vmatpush.msra.mxu0 %v54
    %187 = vmatpush.msra.mxu0 %v52
    %188 = vmatpush.msra.mxu0 %v50
    %189 = vmatpush.msra.mxu0 %v48
    %190 = vmatpush.msra.mxu0 %v46
    %191 = vmatpush.msra.mxu0 %v44
    %192 = vmatpush.msra.mxu0 %v42
    %193 = vmatpush.msra.mxu0 %v40
    %194 = vmatpush.msra.mxu0 %v38
    %195 = vmatpush.msra.mxu0 %v36
    %196 = vmatpush.msra.mxu0 %v34
    %197 = vmatpush.msra.mxu0 %v32
    %198 = vmatpush.msra.mxu0 %v30
    %199 = vmatpush.msra.mxu0 %v28
    %200 = vmatpush.msra.mxu0 %v26
    %201 = vmatpush.msra.mxu0 %v24
    %202 = vmatmul.f32.gmra.mxu0 %v19
    %v203 = vpop.f32.mrf.mxu0
    %v204 = vadd.f32 %v185, %v203
    %205 = vdwg.mxu0
    %206 = vmatpush.msra.mxu0 %v86
    %207 = vmatpush.msra.mxu0 %v84
    %208 = vmatpush.msra.mxu0 %v82
    %209 = vmatpush.msra.mxu0 %v80
    %210 = vmatpush.msra.mxu0 %v78
    %211 = vmatpush.msra.mxu0 %v76
    %212 = vmatpush.msra.mxu0 %v74
    %213 = vmatpush.msra.mxu0 %v72
    %214 = vmatpush.msra.mxu0 %v70
    %215 = vmatpush.msra.mxu0 %v68
    %216 = vmatpush.msra.mxu0 %v66
    %217 = vmatpush.msra.mxu0 %v64
    %218 = vmatpush.msra.mxu0 %v62
    %219 = vmatpush.msra.mxu0 %v60
    %220 = vmatpush.msra.mxu0 %v58
    %221 = vmatpush.msra.mxu0 %v56
    %222 = vmatmul.f32.gmra.mxu0 %v20
    %v223 = vpop.f32.mrf.mxu0
    %v224 = vadd.f32 %v204, %v223
    %225 = vdwg.mxu0
    %226 = vmatpush.msra.mxu0 %v118
    %227 = vmatpush.msra.mxu0 %v116
    %228 = vmatpush.msra.mxu0 %v114
    %229 = vmatpush.msra.mxu0 %v112
    %230 = vmatpush.msra.mxu0 %v110
    %231 = vmatpush.msra.mxu0 %v108
    %232 = vmatpush.msra.mxu0 %v106
    %233 = vmatpush.msra.mxu0 %v104
    %234 = vmatpush.msra.mxu0 %v102
    %235 = vmatpush.msra.mxu0 %v100
    %236 = vmatpush.msra.mxu0 %v98
    %237 = vmatpush.msra.mxu0 %v96
    %238 = vmatpush.msra.mxu0 %v94
    %239 = vmatpush.msra.mxu0 %v92
    %240 = vmatpush.msra.mxu0 %v90
    %241 = vmatpush.msra.mxu0 %v88
    %242 = vmatmul.f32.gmra.mxu0 %v21
    %v243 = vpop.f32.mrf.mxu0
    %v244 = vadd.f32 %v224, %v243
    %245 = vdwg.mxu0
    %246 = vmatpush.msra.mxu0 %v150
    %247 = vmatpush.msra.mxu0 %v148
    %248 = vmatpush.msra.mxu0 %v146
    %249 = vmatpush.msra.mxu0 %v144
    %250 = vmatpush.msra.mxu0 %v142
    %251 = vmatpush.msra.mxu0 %v140
    %252 = vmatpush.msra.mxu0 %v138
    %253 = vmatpush.msra.mxu0 %v136
    %254 = vmatpush.msra.mxu0 %v134
    %255 = vmatpush.msra.mxu0 %v132
    %256 = vmatpush.msra.mxu0 %v130
    %257 = vmatpush.msra.mxu0 %v128
    %258 = vmatpush.msra.mxu0 %v126
    %259 = vmatpush.msra.mxu0 %v124
    %260 = vmatpush.msra.mxu0 %v122
    %261 = vmatpush.msra.mxu0 %v120
    %262 = vmatmul.f32.gmra.mxu0 %v22
    %v263 = vpop.f32.mrf.mxu0
    %v264 = vadd.f32 %v244, %v263
    %265 = vdwg.mxu0
    %266 = vmatpush.msra.mxu0 %v182
    %267 = vmatpush.msra.mxu0 %v180
    %268 = vmatpush.msra.mxu0 %v178
    %269 = vmatpush.msra.mxu0 %v176
    %270 = vmatpush.msra.mxu0 %v174
    %271 = vmatpush.msra.mxu0 %v172
    %272 = vmatpush.msra.mxu0 %v170
    %273 = vmatpush.msra.mxu0 %v168
    %274 = vmatpush.msra.mxu0 %v166
    %275 = vmatpush.msra.mxu0 %v164
    %276 = vmatpush.msra.mxu0 %v162
    %277 = vmatpush.msra.mxu0 %v160
    %278 = vmatpush.msra.mxu0 %v158
    %279 = vmatpush.msra.mxu0 %v156
    %280 = vmatpush.msra.mxu0 %v154
    %281 = vmatpush.msra.mxu0 %v152
    %282 = vmatmul.f32.gmra.mxu0 %v23
    %v283 = vpop.f32.mrf.mxu0
    %v284 = vadd.f32 %v264, %v283
    %285 = vdwg.mxu0
    %286 = vmatpush.msra.mxu0 %v55
    %287 = vmatpush.msra.mxu0 %v53
    %288 = vmatpush.msra.mxu0 %v51
    %289 = vmatpush.msra.mxu0 %v49
    %290 = vmatpush.msra.mxu0 %v47
    %291 = vmatpush.msra.mxu0 %v45
    %292 = vmatpush.msra.mxu0 %v43
    %293 = vmatpush.msra.mxu0 %v41
    %294 = vmatpush.msra.mxu0 %v39
    %295 = vmatpush.msra.mxu0 %v37
    %296 = vmatpush.msra.mxu0 %v35
    %297 = vmatpush.msra.mxu0 %v33
    %298 = vmatpush.msra.mxu0 %v31
    %299 = vmatpush.msra.mxu0 %v29
    %300 = vmatpush.msra.mxu0 %v27
    %301 = vmatpush.msra.mxu0 %v25
    %302 = vmatmul.f32.gmra.mxu0 %v19
    %v303 = vpop.f32.mrf.mxu0
    %v304 = vadd.f32 %v185, %v303
    %305 = vdwg.mxu0
    %306 = vmatpush.msra.mxu0 %v87
    %307 = vmatpush.msra.mxu0 %v85
    %308 = vmatpush.msra.mxu0 %v83
    %309 = vmatpush.msra.mxu0 %v81
    %310 = vmatpush.msra.mxu0 %v79
    %311 = vmatpush.msra.mxu0 %v77
    %312 = vmatpush.msra.mxu0 %v75
    %313 = vmatpush.msra.mxu0 %v73
    %314 = vmatpush.msra.mxu0 %v71
    %315 = vmatpush.msra.mxu0 %v69
    %316 = vmatpush.msra.mxu0 %v67
    %317 = vmatpush.msra.mxu0 %v65
    %318 = vmatpush.msra.mxu0 %v63
    %319 = vmatpush.msra.mxu0 %v61
    %320 = vmatpush.msra.mxu0 %v59
    %321 = vmatpush.msra.mxu0 %v57
    %322 = vmatmul.f32.gmra.mxu0 %v20
    %v323 = vpop.f32.mrf.mxu0
    %v324 = vadd.f32 %v304, %v323
    %325 = vdwg.mxu0
    %326 = vmatpush.msra.mxu0 %v119
    %327 = vmatpush.msra.mxu0 %v117
    %328 = vmatpush.msra.mxu0 %v115
    %329 = vmatpush.msra.mxu0 %v113
    %330 = vmatpush.msra.mxu0 %v111
    %331 = vmatpush.msra.mxu0 %v109
    %332 = vmatpush.msra.mxu0 %v107
    %333 = vmatpush.msra.mxu0 %v105
    %334 = vmatpush.msra.mxu0 %v103
    %335 = vmatpush.msra.mxu0 %v101
    %336 = vmatpush.msra.mxu0 %v99
    %337 = vmatpush.msra.mxu0 %v97
    %338 = vmatpush.msra.mxu0 %v95
    %339 = vmatpush.msra.mxu0 %v93
    %340 = vmatpush.msra.mxu0 %v91
    %341 = vmatpush.msra.mxu0 %v89
    %342 = vmatmul.f32.gmra.mxu0 %v21
    %v343 = vpop.f32.mrf.mxu0
    %v344 = vadd.f32 %v324, %v343
    %345 = vdwg.mxu0
    %346 = vmatpush.msra.mxu0 %v151
    %347 = vmatpush.msra.mxu0 %v149
    %348 = vmatpush.msra.mxu0 %v147
    %349 = vmatpush.msra.mxu0 %v145
    %350 = vmatpush.msra.mxu0 %v143
    %351 = vmatpush.msra.mxu0 %v141
    %352 = vmatpush.msra.mxu0 %v139
    %353 = vmatpush.msra.mxu0 %v137
    %354 = vmatpush.msra.mxu0 %v135
    %355 = vmatpush.msra.mxu0 %v133
    %356 = vmatpush.msra.mxu0 %v131
    %357 = vmatpush.msra.mxu0 %v129
    %358 = vmatpush.msra.mxu0 %v127
    %359 = vmatpush.msra.mxu0 %v125
    %360 = vmatpush.msra.mxu0 %v123
    %361 = vmatpush.msra.mxu0 %v121
    %362 = vmatmul.f32.gmra.mxu0 %v22
    %v363 = vpop.f32.mrf.mxu0
    %v364 = vadd.f32 %v344, %v363
    %365 = vdwg.mxu0
    %366 = vmatpush.msra.mxu0 %v183
    %367 = vmatpush.msra.mxu0 %v181
    %368 = vmatpush.msra.mxu0 %v179
    %369 = vmatpush.msra.mxu0 %v177
    %370 = vmatpush.msra.mxu0 %v175
    %371 = vmatpush.msra.mxu0 %v173
    %372 = vmatpush.msra.mxu0 %v171
    %373 = vmatpush.msra.mxu0 %v169
    %374 = vmatpush.msra.mxu0 %v167
    %375 = vmatpush.msra.mxu0 %v165
    %376 = vmatpush.msra.mxu0 %v163
    %377 = vmatpush.msra.mxu0 %v161
    %378 = vmatpush.msra.mxu0 %v159
    %379 = vmatpush.msra.mxu0 %v157
    %380 = vmatpush.msra.mxu0 %v155
    %381 = vmatpush.msra.mxu0 %v153
    %382 = vmatmul.f32.gmra.mxu0 %v23
    %v383 = vpop.f32.mrf.mxu0
    %v384 = vadd.f32 %v364, %v383
    %385 = vdwg.mxu0
    %v386 = vmax.f32 %v284, 0.0
    %v387 = vmax.f32 %v384, 0.0
    %v388 = vld [vmem:[%s3] sm:$0xff]
    %v389 = vld [vmem:[%s3 + $0x8] sm:$0xff]
    %v390 = vld [vmem:[%s3 + $0x10] sm:$0xff]
    %v391 = vld [vmem:[%s3 + $0x18] sm:$0xff]
    %v392 = vld [vmem:[%s3 + $0x20] sm:$0xff]
    %v393 = vld [vmem:[%s3 + $0x28] sm:$0xff]
    %v394 = vld [vmem:[%s3 + $0x30] sm:$0xff]
    %v395 = vld [vmem:[%s3 + $0x38] sm:$0xff]
    %v396 = vld [vmem:[%s3 + $0x40] sm:$0xff]
    %v397 = vld [vmem:[%s3 + $0x48] sm:$0xff]
    %v398 = vld [vmem:[%s3 + $0x50] sm:$0xff]
    %v399 = vld [vmem:[%s3 + $0x58] sm:$0xff]
    %v400 = vld [vmem:[%s3 + $0x60] sm:$0xff]
    %v401 = vld [vmem:[%s3 + $0x68] sm:$0xff]
    %v402 = vld [vmem:[%s3 + $0x70] sm:$0xff]
    %v403 = vld [vmem:[%s3 + $0x78] sm:$0xff]
    %v404 = vld [vmem:[%s3 + $0x80] sm:$0xff]
    %v405 = vld [vmem:[%s3 + $0x88] sm:$0xff]
    %v406 = vld [vmem:[%s3 + $0x90] sm:$0xff]
    %v407 = vld [vmem:[%s3 + $0x98] sm:$0xff]
    %vm408 = vcmask 261120
    %v410 = vsel %vm408, %v387, 0
    %412 = vmatpush.msra.mxu0 %v403
    %413 = vmatpush.msra.mxu0 %v402
    %414 = vmatpush.msra.mxu0 %v401
    %415 = vmatpush.msra.mxu0 %v400
    %416 = vmatpush.msra.mxu0 %v399
    %417 = vmatpush.msra.mxu0 %v398
    %418 = vmatpush.msra.mxu0 %v397
    %419 = vmatpush.msra.mxu0 %v396
    %420 = vmatpush.msra.mxu0 %v395
    %421 = vmatpush.msra.mxu0 %v394
    %422 = vmatpush.msra.mxu0 %v393
    %423 = vmatpush.msra.mxu0 %v392
    %424 = vmatpush.msra.mxu0 %v391
    %425 = vmatpush.msra.mxu0 %v390
    %426 = vmatpush.msra.mxu0 %v389
    %427 = vmatpush.msra.mxu0 %v388
    %428 = vmatmul.f32.gmra.mxu0 %v386
    %v429 = vpop.f32.mrf.mxu0
    %v430 = vadd.f32 0.0, %v429
    %431 = vdwg.mxu0
    %432 = vmatpush.msra.mxu0 0.0
    %433 = vmatpush.msra.mxu0 0.0
    %434 = vmatpush.msra.mxu0 0.0
    %435 = vmatpush.msra.mxu0 0.0
    %436 = vmatpush.msra.mxu0 0.0
    %437 = vmatpush.msra.mxu0 0.0
    %438 = vmatpush.msra.mxu0 0.0
    %439 = vmatpush.msra.mxu0 0.0
    %440 = vmatpush.msra.mxu0 0.0
    %441 = vmatpush.msra.mxu0 0.0
    %442 = vmatpush.msra.mxu0 0.0
    %443 = vmatpush.msra.mxu0 0.0
    %444 = vmatpush.msra.mxu0 %v407
    %445 = vmatpush.msra.mxu0 %v406
    %446 = vmatpush.msra.mxu0 %v405
    %447 = vmatpush.msra.mxu0 %v404
    %448 = vmatmul.f32.gmra.mxu0 %v410
    %v449 = vpop.f32.mrf.mxu0
    %v450 = vadd.f32 %v430, %v449
    %451 = vdwg.mxu0
    %452 = vst [vmem:[#allocation3] sm:$0xff] %v450
    // Predicated region
    $region18: #{tpu_custom_call.1} parent=1 // pred_check
      _
    $region19: #{tpu_custom_call.1} parent=1 // pred_check_branch
      %454 = sbr.rel (0) target = $region21
    $region20: #{tpu_custom_call.1} parent=1 // pred_region
      %456 = vsyncadd [#allocation4], 0
      %s458 = sshll.u32 [#allocation3], 4
      %s459 = int_to_ptr.vmem [resolvable:$true] %s458
      %s460 = sshll.u32 %s4, 4
      %s461 = int_to_ptr.hbm [resolvable:$true] %s460
      %463 = dma.vmem_to_hbm [thread:$0]  %s459, 128, %s461, [#allocation4]
    $region21: #{tpu_custom_call.1} parent=1 // pred_fallthru
      _
    // Predicated region
    $region22: #{tpu_custom_call.1} parent=1 // pred_check
      _
    $region23: #{tpu_custom_call.1} parent=1 // pred_check_branch
      %465 = sbr.rel (0) target = $region25
    $region24: #{tpu_custom_call.1} parent=1 // pred_region
      %467 = dma.done [#allocation4], 128
    $region25: #{tpu_custom_call.1} parent=1 // pred_fallthru
      _
    %468 = vsyncpa [#allocation4], 1

</llo_original>
